<compile_context>
chip_gen: v6e
topology: v6e:2x2x1
jax: 0.10.0
libtpu: 0.0.40
codegen_flags: <defaults>
</compile_context>

<pallas_src>
import functools
import math

import jax
import jax.numpy as jnp
from jax.experimental import pallas as pl
from jax.experimental.pallas import tpu as pltpu


def _round_up(x, d):
    return (x + d - 1) // d * d


# ----------------------------- Pallas kernels ------------------------------- #
def _conv_bn_kernel(p_ref, w_ref, shift_ref, o_ref, *, apply_relu):
    # bf16 x bf16 on the MXU, f32 accumulate; BN scale already folded into w.
    acc = jnp.dot(p_ref[...], w_ref[...], preferred_element_type=jnp.float32)
    y = acc + shift_ref[...]
    if apply_relu:
        y = jnp.maximum(y, 0.0)
    o_ref[...] = y.astype(o_ref.dtype)


def _conv_bn_res_kernel(p_ref, w_ref, shift_ref, res_ref, o_ref, *, apply_relu):
    acc = jnp.dot(p_ref[...], w_ref[...], preferred_element_type=jnp.float32)
    y = acc + shift_ref[...] + res_ref[...].astype(jnp.float32)
    if apply_relu:
        y = jnp.maximum(y, 0.0)
    o_ref[...] = y.astype(o_ref.dtype)


# ------------------------------ host helpers -------------------------------- #
def _im2col(x_nhwc, kh, kw, stride, pad):
    x = jnp.pad(x_nhwc, ((0, 0), (pad, pad), (pad, pad), (0, 0)))
    n, hp, wp, c = x.shape
    oh = (hp - kh) // stride + 1
    ow = (wp - kw) // stride + 1
    cols = []
    for i in range(kh):
        for j in range(kw):
            cols.append(
                x[:, i : i + stride * (oh - 1) + 1 : stride,
                     j : j + stride * (ow - 1) + 1 : stride, :]
            )
    patches = jnp.concatenate(cols, axis=-1)  # (N, OH, OW, KH*KW*Cin)
    return patches.reshape(n * oh * ow, kh * kw * c), n, oh, ow


def conv_bn_act(x_nhwc, w_oihw, bn, stride, residual_nhwc=None, relu=False):
    """ConvNormLayer forward (conv2d pad=(k-1)//2, no bias, + BN), optionally
    fused with a residual add and ReLU — one Pallas call."""
    cout, cin, kh, kw = w_oihw.shape
    pad = (kh - 1) // 2

    # bf16 activations -> halve the im2col slab traffic into the kernel.
    patches, n, oh, ow = _im2col(x_nhwc.astype(jnp.bfloat16), kh, kw, stride, pad)
    m, k = patches.shape

    # Fold BN (eval mode) into the weights / bias.
    gamma, beta, mean, var, eps = bn
    scale = gamma / jnp.sqrt(var + eps)          # (cout,)
    shift = beta - mean * scale                  # (cout,)

    # PyTorch weight (Cout, Cin, KH, KW) -> (KH*KW*Cin, Cout), BN scale folded in.
    w2d = jnp.transpose(w_oihw, (2, 3, 1, 0)).reshape(kh * kw * cin, cout)
    w2d = w2d * scale[None, :]

    # Lane-dense output: pad Cout to a multiple of 128. Pad M to tile multiple.
    cout_pad = _round_up(cout, 128)
    m_pad = _round_up(m, 128)

    # Tile-M selection: largest tile that divides padded M and fits a VMEM budget
    # that is safe on v7x (64 MiB / TC) while amortizing per-step overhead.
    tile_m = 128
    for cand in (1024, 512, 256):
        dyn_bytes = (2 * cand * k * 2            # double-buffered bf16 patches
                     + 2 * cand * cout_pad * 4   # double-buffered f32 output
                     + 2 * cand * cout_pad * 2)  # double-buffered bf16 residual
        if m_pad % cand == 0 and dyn_bytes < 20 * 1024 * 1024:
            tile_m = cand
            break

    patches_p = jnp.pad(patches, ((0, m_pad - m), (0, 0)))
    w_p = jnp.pad(w2d, ((0, 0), (0, cout_pad - cout))).astype(jnp.bfloat16)
    shift_p = jnp.pad(shift.reshape(1, cout).astype(jnp.float32),
                      ((0, 0), (0, cout_pad - cout)))

    in_specs = [
        pl.BlockSpec((tile_m, k), lambda i: (i, 0)),        # patches tile
        pl.BlockSpec((k, cout_pad), lambda i: (0, 0)),      # resident weights
        pl.BlockSpec((1, cout_pad), lambda i: (0, 0)),      # folded BN shift
    ]
    args = [patches_p, w_p, shift_p]

    if residual_nhwc is None:
        kernel = functools.partial(_conv_bn_kernel, apply_relu=relu)
    else:
        res = residual_nhwc.reshape(m, cout).astype(jnp.bfloat16)
        res_p = jnp.pad(res, ((0, m_pad - m), (0, cout_pad - cout)))
        in_specs.append(pl.BlockSpec((tile_m, cout_pad), lambda i: (i, 0)))
        args.append(res_p)
        kernel = functools.partial(_conv_bn_res_kernel, apply_relu=relu)

    # Explicit VMEM budget (default scoped limit on v5e is only 16 MiB).
    est_bytes = (2 * tile_m * k * 2 + 2 * k * cout_pad * 2
                 + 2 * tile_m * cout_pad * 4 + 2 * tile_m * cout_pad * 2
                 + (1 << 20))
    vmem_limit = int(min(56 * 1024 * 1024, max(est_bytes + (8 << 20), 16 * 1024 * 1024)))

    out = pl.pallas_call(
        kernel,
        out_shape=jax.ShapeDtypeStruct((m_pad, cout_pad), jnp.float32),
        grid_spec=pltpu.PrefetchScalarGridSpec(
            num_scalar_prefetch=0,
            grid=(m_pad // tile_m,),
            in_specs=in_specs,
            out_specs=pl.BlockSpec((tile_m, cout_pad), lambda i: (i, 0)),
        ),
        compiler_params=pltpu.CompilerParams(
            dimension_semantics=("parallel",),
            vmem_limit_bytes=vmem_limit,
        ),
    )(*args)

    out = out[:m, :cout]
    return out.reshape(n, oh, ow, cout)


# --------------------------- parameter init --------------------------------- #
def init_conv_bn(key, cin, cout, ksize):
    kconv, kbn = jax.random.split(key)
    bound = 1.0 / math.sqrt(cin * ksize * ksize)
    w = jax.random.uniform(kconv, (cout, cin, ksize, ksize), jnp.float32, -bound, bound)
    kg, kb, km, kv = jax.random.split(kbn, 4)
    gamma = jax.random.uniform(kg, (cout,), jnp.float32, 0.5, 1.5)
    beta = jax.random.uniform(kb, (cout,), jnp.float32, -0.5, 0.5)
    mean = jax.random.uniform(km, (cout,), jnp.float32, -0.1, 0.1)
    var = jax.random.uniform(kv, (cout,), jnp.float32, 0.5, 1.5)
    return dict(w=w, bn=(gamma, beta, mean, var, 1e-5))


def init_blocks(key, in_channels, out_channels, count, stride):
    """Mirror of a Blocks stage built from BasicBlock (expansion=1)."""
    expansion = 1
    params = []
    keys = jax.random.split(key, count * 3)
    for idx in range(count):
        s = stride if idx == 0 else 1
        cin = in_channels if idx == 0 else out_channels * expansion
        blk = {
            "a": init_conv_bn(keys[idx * 3 + 0], cin, out_channels, 3),
            "b": init_conv_bn(keys[idx * 3 + 1], out_channels, out_channels * expansion, 3),
            "stride": s,
        }
        if s != 1 or cin != out_channels * expansion:
            blk["ds"] = init_conv_bn(keys[idx * 3 + 2], cin, out_channels * expansion, 1)
        params.append(blk)
    return params


# ------------------------------ forward -------------------------------------- #
def basic_block_forward(x_nhwc, blk):
    out = conv_bn_act(x_nhwc, blk["a"]["w"], blk["a"]["bn"], blk["stride"], relu=True)
    if "ds" in blk:
        short = conv_bn_act(x_nhwc, blk["ds"]["w"], blk["ds"]["bn"], blk["stride"], relu=False)
    else:
        short = x_nhwc
    # TODO(synk): conv-a and conv-b could be fused into a single pallas_call
    #             (intermediate kept in VMEM) to remove one HBM round-trip.
    out = conv_bn_act(out, blk["b"]["w"], blk["b"]["bn"], 1, residual_nhwc=short, relu=True)
    return out


def blocks_forward(x_nchw, params):
    x = jnp.transpose(x_nchw, (0, 2, 3, 1))  # NCHW -> NHWC
    for blk in params:
        x = basic_block_forward(x, blk)
    return jnp.transpose(x, (0, 3, 1, 2))    # back to NCHW (PyTorch convention)


# ------------------------------ references ----------------------------------- #
def _ref_conv_bn_act(x, w_oihw, bn, stride, residual=None, relu=False, mimic_bf16=False):
    cout, cin, kh, kw = w_oihw.shape
    pad = (kh - 1) // 2
    gamma, beta, mean, var, eps = bn
    scale = gamma / jnp.sqrt(var + eps)
    shift = beta - mean * scale
    w_hwio = jnp.transpose(w_oihw, (2, 3, 1, 0))
    if mimic_bf16:
        # Mirror the kernel's math exactly: BN scale folded into bf16 weights,
        # bf16 activations, f32 accumulation, f32 epilogue.
        w_hwio = (w_hwio * scale).astype(jnp.bfloat16)
        y = jax.lax.conv_general_dilated(
            x.astype(jnp.bfloat16), w_hwio, (stride, stride), ((pad, pad), (pad, pad)),
            dimension_numbers=("NHWC", "HWIO", "NHWC"),
            preferred_element_type=jnp.float32)
        y = y + shift
    else:
        y = jax.lax.conv_general_dilated(
            x, w_hwio, (stride, stride), ((pad, pad), (pad, pad)),
            dimension_numbers=("NHWC", "HWIO", "NHWC"),
            precision=jax.lax.Precision.HIGHEST)
        y = y * scale + shift
    if residual is not None:
        r = residual.astype(jnp.bfloat16).astype(jnp.float32) if mimic_bf16 else residual
        y = y + r
    if relu:
        y = jnp.maximum(y, 0.0)
    return y


def _ref_blocks_forward(x_nchw, params, mimic_bf16=False):
    x = jnp.transpose(x_nchw, (0, 2, 3, 1))
    for blk in params:
        out = _ref_conv_bn_act(x, blk["a"]["w"], blk["a"]["bn"], blk["stride"],
                               relu=True, mimic_bf16=mimic_bf16)
        short = (_ref_conv_bn_act(x, blk["ds"]["w"], blk["ds"]["bn"], blk["stride"],
                                  mimic_bf16=mimic_bf16)
                 if "ds" in blk else x)
        x = _ref_conv_bn_act(out, blk["b"]["w"], blk["b"]["bn"], 1,
                             residual=short, relu=True, mimic_bf16=mimic_bf16)
    return jnp.transpose(x, (0, 3, 1, 2))


# -------------------------------- main ---------------------------------------- #
if __name__ == "__main__":
    key = jax.random.PRNGKey(0)
    kx, kp = jax.random.split(key)

    # Blocks(BasicBlock, in_channels=4, out_channels=8, count=2, stride=2)
    N, C, H, W = 2, 4, 16, 16
    x = jax.random.normal(kx, (N, C, H, W), jnp.float32)
    params = init_blocks(kp, in_channels=4, out_channels=8, count=2, stride=2)

    y = jax.block_until_ready(blocks_forward(x, params))
    assert y.shape == (N, 8, H // 2, W // 2), y.shape

    # Tight check against an XLA conv performing the identical bf16-input /
    # f32-accumulate math (validates the kernel algorithm itself).
    y_ref_bf16 = jax.block_until_ready(_ref_blocks_forward(x, params, mimic_bf16=True))
    assert jnp.allclose(y, y_ref_bf16, atol=2e-3, rtol=2e-3), \
        float(jnp.max(jnp.abs(y - y_ref_bf16)))

    # Looser check against the full-f32 reference (bf16 quantization noise only).
    y_ref_f32 = jax.block_until_ready(_ref_blocks_forward(x, params, mimic_bf16=False))
    assert jnp.allclose(y, y_ref_f32, atol=3e-2, rtol=3e-2), \
        float(jnp.max(jnp.abs(y - y_ref_f32)))

    print("KERNEL_OK")
</pallas_src>

<mosaic_0001>
module attributes {stable_mosaic.version = 11 : i64} {
  func.func @_conv_bn_kernel(%arg0: i32, %arg1: memref<128x36xbf16, #tpu.memory_space<vmem>>, %arg2: memref<36x128xbf16, #tpu.memory_space<vmem>>, %arg3: memref<1x128xf32, #tpu.memory_space<vmem>>, %arg4: memref<128x128xf32, #tpu.memory_space<vmem>>) attributes {dimension_semantics = [#tpu.dimension_semantics<parallel>], iteration_bounds = array<i64: 1>, scalar_prefetch = 0 : i64, scratch_operands = 0 : i64, tpu.core_type = #tpu.core_type<tc>, window_params = [{transform_indices = @transform_0, window_bounds = array<i64: 128, 36>}, {pipeline_mode = #tpu.pipeline_mode<synchronous>, transform_indices = @transform_1, window_bounds = array<i64: 36, 128>}, {pipeline_mode = #tpu.pipeline_mode<synchronous>, transform_indices = @transform_2, window_bounds = array<i64: 1, 128>}, {transform_indices = @transform_3, window_bounds = array<i64: 128, 128>}]} {
    %c0 = arith.constant 0 : index
    %c0_0 = arith.constant 0 : index
    %0 = vector.load %arg1[%c0, %c0_0] : memref<128x36xbf16, #tpu.memory_space<vmem>>, vector<128x36xbf16>
    %c0_1 = arith.constant 0 : index
    %c0_2 = arith.constant 0 : index
    %1 = vector.load %arg2[%c0_1, %c0_2] : memref<36x128xbf16, #tpu.memory_space<vmem>>, vector<36x128xbf16>
    %cst = arith.constant dense<0.000000e+00> : vector<128x128xf32>
    %2 = tpu.matmul %0, %1, %cst {dimension_numbers = #tpu.dot_dimension_numbers<[1], [0], [0], [1], [0, 0, 1, 1], [], []>} : vector<128x36xbf16>, vector<36x128xbf16>, vector<128x128xf32> -> vector<128x128xf32>
    %c0_3 = arith.constant 0 : index
    %c0_4 = arith.constant 0 : index
    %3 = vector.load %arg3[%c0_3, %c0_4] : memref<1x128xf32, #tpu.memory_space<vmem>>, vector<1x128xf32>
    %4 = vector.broadcast %3 : vector<1x128xf32> to vector<128x128xf32>
    %5 = arith.addf %2, %4 : vector<128x128xf32>
    %cst_5 = arith.constant 0.000000e+00 : f32
    %6 = vector.broadcast %cst_5 : f32 to vector<128x128xf32>
    %7 = arith.maximumf %5, %6 : vector<128x128xf32>
    %c0_6 = arith.constant 0 : index
    %c0_7 = arith.constant 0 : index
    %8 = vector.load %arg4[%c0_6, %c0_7] : memref<128x128xf32, #tpu.memory_space<vmem>>, vector<128x128xf32>
    tpu.vector_store %arg4[%c0_6, %c0_7], %7 {strides = array<i32>} : memref<128x128xf32, #tpu.memory_space<vmem>>, vector<128x128xf32>,
    return
  }
  func.func @transform_0(%arg0: i32) -> (i32, i32) {
    %c0_i32 = arith.constant 0 : i32
    %c0_i32_0 = arith.constant 0 : i32
    return %arg0, %c0_i32 : i32, i32
  }
  func.func @transform_1(%arg0: i32) -> (i32, i32) {
    %c0_i32 = arith.constant 0 : i32
    %c0_i32_0 = arith.constant 0 : i32
    %c0_i32_1 = arith.constant 0 : i32
    return %c0_i32, %c0_i32_0 : i32, i32
  }
  func.func @transform_2(%arg0: i32) -> (i32, i32) {
    %c0_i32 = arith.constant 0 : i32
    %c0_i32_0 = arith.constant 0 : i32
    %c0_i32_1 = arith.constant 0 : i32
    return %c0_i32, %c0_i32_0 : i32, i32
  }
  func.func @transform_3(%arg0: i32) -> (i32, i32) {
    %c0_i32 = arith.constant 0 : i32
    %c0_i32_0 = arith.constant 0 : i32
    return %arg0, %c0_i32 : i32, i32
  }
}

</mosaic_0001>

<llo_original>
// kernel: tpu_custom_call.1
$region0: #{tpu_custom_call.1}
  #allocation0 [shape = 'u32[]', space=smem, size = 0x4, offset = 0x4, fixed_abs, tag = 'smem constant byte address 0x4 - core index']
  #allocation1 [shape = 'u32[144,128]{1,0:T(1,128)}', space=vmem, size = 0x12000, scoped, tag = 'internal scratch']
  %s0 = inlined_call_operand.vmem [shape: bf16[128,36], index: 0, kind: input, shape index: {}]
  %s1 = inlined_call_operand.vmem [shape: bf16[36,128], index: 1, kind: input, shape index: {}]
  %s2 = inlined_call_operand.vmem [shape: f32[1,128], index: 2, kind: input, shape index: {}]
  %s3 = inlined_call_operand.hbm [shape: f32[128,128], index: 3, kind: output, shape index: {}]
  %s4 = sld [smem:[#allocation0]]
  $region22: #{tpu_custom_call.1} parent=0
    _
  %s6 = ssub.s32 1, %s4
  %s7 = scalar_select 0, %s6, %s4
  $region1: #{tpu_custom_call.1} parent=0
    #allocation2 [shape = 'u8[65536]{0}', space=vmem, size = 0x10000, scoped, tag = 'output window, operand 0, single buffered']
    #allocation3 [shape = 's32[1]{0}', space=sflag, size = 0x4, scoped, tag = 'scoped memory for tpu_custom_call.1']
    %8 = vsyncpa [#allocation3], 0
    // Predicated region
    $region2: #{tpu_custom_call.1} parent=1 // pred_check
      _
    $region3: #{tpu_custom_call.1} parent=1 // pred_check_branch
      %10 = sbr.rel (0) target = $region5
    $region4: #{tpu_custom_call.1} parent=1 // pred_region
      _
    $region5: #{tpu_custom_call.1} parent=1 // pred_fallthru
      _
    // Predicated region
    $region6: #{tpu_custom_call.1} parent=1 // pred_check
      _
    $region7: #{tpu_custom_call.1} parent=1 // pred_check_branch
      %12 = sbr.rel (0) target = $region9
    $region8: #{tpu_custom_call.1} parent=1 // pred_region
      _
    $region9: #{tpu_custom_call.1} parent=1 // pred_fallthru
      _
    // Predicated region
    $region10: #{tpu_custom_call.1} parent=1 // pred_check
      _
    $region11: #{tpu_custom_call.1} parent=1 // pred_check_branch
      %14 = sbr.rel (0) target = $region13
    $region12: #{tpu_custom_call.1} parent=1 // pred_region
      _
    $region13: #{tpu_custom_call.1} parent=1 // pred_fallthru
      _
    %v16 = vld [vmem:[%s0] sm:$0xf]
    %v17 = vld [vmem:[%s0 + $0x4] sm:$0xf]
    %v18 = vld [vmem:[%s0 + $0x8] sm:$0xf]
    %v19 = vld [vmem:[%s0 + $0xc] sm:$0xf]
    %v20 = vld [vmem:[%s0 + $0x10] sm:$0xf]
    %v21 = vld [vmem:[%s0 + $0x14] sm:$0xf]
    %v22 = vld [vmem:[%s0 + $0x18] sm:$0xf]
    %v23 = vld [vmem:[%s0 + $0x1c] sm:$0xf]
    %v24 = vld [vmem:[%s0 + $0x20] sm:$0xf]
    %v25 = vld [vmem:[%s0 + $0x24] sm:$0xf]
    %v26 = vld [vmem:[%s0 + $0x28] sm:$0xf]
    %v27 = vld [vmem:[%s0 + $0x2c] sm:$0xf]
    %v28 = vld [vmem:[%s0 + $0x30] sm:$0xf]
    %v29 = vld [vmem:[%s0 + $0x34] sm:$0xf]
    %v30 = vld [vmem:[%s0 + $0x38] sm:$0xf]
    %v31 = vld [vmem:[%s0 + $0x3c] sm:$0xf]
    %v32 = vld [vmem:[%s1] sm:$0xf]
    %v33 = vld [vmem:[%s1 + $0x4] sm:$0xf]
    %v34 = vld [vmem:[%s1 + $0x8] sm:$0xf]
    %v35 = vld [vmem:[%s1 + $0xc] sm:$0xf]
    %v36 = vld [vmem:[%s1 + $0x10] sm:$0x3]
    %v37 = vld [vmem:[%s2] sm:$0x1]
    %v39 = vlaneseq
    %v40 = vshrl.u32 %v39, 7
    %v41 = vsub.s32 0, %v40
    %v42 = vrot.slane %v37, %v41
    %v60 = vunpack.c.l.b16 %v16
    %v61 = vunpack.c.l.b16 %v17
    %v62 = vunpack.c.l.b16 %v18
    %v63 = vunpack.c.l.b16 %v19
    %v64 = vunpack.c.l.b16 %v20
    %v65 = vunpack.c.l.b16 %v21
    %v66 = vunpack.c.l.b16 %v22
    %v67 = vunpack.c.l.b16 %v23
    %v68 = vunpack.c.l.b16 %v24
    %v69 = vunpack.c.l.b16 %v25
    %v70 = vunpack.c.l.b16 %v26
    %v71 = vunpack.c.l.b16 %v27
    %v72 = vunpack.c.l.b16 %v28
    %v73 = vunpack.c.l.b16 %v29
    %v74 = vunpack.c.l.b16 %v30
    %v75 = vunpack.c.l.b16 %v31
    %v76 = vpack.c.b16 %v61, %v60
    %v77 = vpack.c.b16 %v63, %v62
    %v78 = vpack.c.b16 %v65, %v64
    %v79 = vpack.c.b16 %v67, %v66
    %v80 = vpack.c.b16 %v69, %v68
    %v81 = vpack.c.b16 %v71, %v70
    %v82 = vpack.c.b16 %v73, %v72
    %v83 = vpack.c.b16 %v75, %v74
    %v89 = vunpack.c.l.b16 %v32
    %v90 = vunpack.c.l.b16 %v33
    %v91 = vunpack.c.l.b16 %v34
    %v92 = vunpack.c.l.b16 %v35
    %v93 = vunpack.c.l.b16 %v36
    %v94 = vpack.c.b16 %v90, %v89
    %v95 = vpack.c.b16 %v92, %v91
    %v96 = vpack.c.b16 %v93, %v93
    %vm99 = vcmask 293888
    %v101 = vsel %vm99, %v76, 0
    %v104 = vsel %vm99, %v77, 0
    %v107 = vsel %vm99, %v78, 0
    %v110 = vsel %vm99, %v79, 0
    %v113 = vsel %vm99, %v80, 0
    %v116 = vsel %vm99, %v81, 0
    %v119 = vsel %vm99, %v82, 0
    %v122 = vsel %vm99, %v83, 0
    %vm124 = vcmask 1041408
    %v126 = vsel %vm124, %v96, 0
    %128 = vmatprep.subr.bf16.mxu0 0
    %129 = vmatpush1.bf16.msra.mxu0 0
    %130 = vmatprep.subr.bf16.mxu0 0
    %131 = vmatpush1.bf16.msra.mxu0 0
    %132 = vmatprep.subr.bf16.mxu0 0
    %133 = vmatpush1.bf16.msra.mxu0 0
    %134 = vmatprep.subr.bf16.mxu0 0
    %135 = vmatpush1.bf16.msra.mxu0 0
    %136 = vmatprep.subr.bf16.mxu0 0
    %137 = vmatpush1.bf16.msra.mxu0 0
    %138 = vmatprep.subr.bf16.mxu0 0
    %139 = vmatpush1.bf16.msra.mxu0 %v126
    %140 = vmatprep.subr.bf16.mxu0 0
    %141 = vmatpush1.bf16.msra.mxu0 %v95
    %142 = vmatprep.subr.bf16.mxu0 0
    %143 = vmatpush1.bf16.msra.mxu0 %v94
    %144 = vmatprep.subr.bf16.mxu0 0
    %145 = vmatpush2.bf16.msra.mxu0 0
    %146 = vmatprep.subr.bf16.mxu0 0
    %147 = vmatpush2.bf16.msra.mxu0 0
    %148 = vmatprep.subr.bf16.mxu0 0
    %149 = vmatpush2.bf16.msra.mxu0 0
    %150 = vmatprep.subr.bf16.mxu0 0
    %151 = vmatpush2.bf16.msra.mxu0 0
    %152 = vmatprep.subr.bf16.mxu0 0
    %153 = vmatpush2.bf16.msra.mxu0 0
    %154 = vmatprep.subr.bf16.mxu0 0
    %155 = vmatpush2.bf16.msra.mxu0 0
    %156 = vmatprep.subr.bf16.mxu0 0
    %157 = vmatpush2.bf16.msra.mxu0 0
    %158 = vmatprep.subr.bf16.mxu0 0
    %159 = vmatpush2.bf16.msra.mxu0 0
    %160 = vmatprep.mubr.bf16.mxu0 0
    %161 = vmatmul.mubr.bf16.gmra.mxu0 %v101
    %v162 = vpop.f32.mrf.mxu0
    %v163 = vadd.f32 %v42, %v162
    %v164 = vpop.f32.mrf.mxu0
    %v165 = vpop.f32.mrf.mxu0
    %v166 = vadd.f32 %v42, %v165
    %v167 = vpop.f32.mrf.mxu0
    %168 = vmatprep.mubr.bf16.mxu0 0
    %169 = vmatmul.mubr.bf16.gmra.mxu0 %v104
    %v170 = vpop.f32.mrf.mxu0
    %v171 = vadd.f32 %v42, %v170
    %v172 = vpop.f32.mrf.mxu0
    %v173 = vpop.f32.mrf.mxu0
    %v174 = vadd.f32 %v42, %v173
    %v175 = vpop.f32.mrf.mxu0
    %176 = vmatprep.mubr.bf16.mxu0 0
    %177 = vmatmul.mubr.bf16.gmra.mxu0 %v107
    %v178 = vpop.f32.mrf.mxu0
    %v179 = vadd.f32 %v42, %v178
    %v180 = vpop.f32.mrf.mxu0
    %v181 = vpop.f32.mrf.mxu0
    %v182 = vadd.f32 %v42, %v181
    %v183 = vpop.f32.mrf.mxu0
    %184 = vmatprep.mubr.bf16.mxu0 0
    %185 = vmatmul.mubr.bf16.gmra.mxu0 %v110
    %v186 = vpop.f32.mrf.mxu0
    %v187 = vadd.f32 %v42, %v186
    %v188 = vpop.f32.mrf.mxu0
    %v189 = vpop.f32.mrf.mxu0
    %v190 = vadd.f32 %v42, %v189
    %v191 = vpop.f32.mrf.mxu0
    %192 = vmatprep.mubr.bf16.mxu0 0
    %193 = vmatmul.mubr.bf16.gmra.mxu0 %v113
    %v194 = vpop.f32.mrf.mxu0
    %v195 = vadd.f32 %v42, %v194
    %v196 = vpop.f32.mrf.mxu0
    %v197 = vpop.f32.mrf.mxu0
    %v198 = vadd.f32 %v42, %v197
    %v199 = vpop.f32.mrf.mxu0
    %200 = vmatprep.mubr.bf16.mxu0 0
    %201 = vmatmul.mubr.bf16.gmra.mxu0 %v116
    %v202 = vpop.f32.mrf.mxu0
    %v203 = vadd.f32 %v42, %v202
    %v204 = vpop.f32.mrf.mxu0
    %v205 = vpop.f32.mrf.mxu0
    %v206 = vadd.f32 %v42, %v205
    %v207 = vpop.f32.mrf.mxu0
    %208 = vmatprep.mubr.bf16.mxu0 0
    %209 = vmatmul.mubr.bf16.gmra.mxu0 %v119
    %v210 = vpop.f32.mrf.mxu0
    %v211 = vadd.f32 %v42, %v210
    %v212 = vpop.f32.mrf.mxu0
    %v213 = vpop.f32.mrf.mxu0
    %v214 = vadd.f32 %v42, %v213
    %v215 = vpop.f32.mrf.mxu0
    %216 = vmatprep.mubr.bf16.mxu0 0
    %217 = vmatmul.mubr.bf16.gmra.mxu0 %v122
    %v218 = vpop.f32.mrf.mxu0
    %v219 = vadd.f32 %v42, %v218
    %v220 = vpop.f32.mrf.mxu0
    %v221 = vpop.f32.mrf.mxu0
    %v222 = vadd.f32 %v42, %v221
    %v223 = vpop.f32.mrf.mxu0
    %224 = vdwg.mxu0
    %v225 = vmax.f32 %v163, 0.0
    %v226 = vmax.f32 %v166, 0.0
    %v227 = vmax.f32 %v171, 0.0
    %v228 = vmax.f32 %v174, 0.0
    %v229 = vmax.f32 %v179, 0.0
    %v230 = vmax.f32 %v182, 0.0
    %v231 = vmax.f32 %v187, 0.0
    %v232 = vmax.f32 %v190, 0.0
    %v233 = vmax.f32 %v195, 0.0
    %v234 = vmax.f32 %v198, 0.0
    %v235 = vmax.f32 %v203, 0.0
    %v236 = vmax.f32 %v206, 0.0
    %v237 = vmax.f32 %v211, 0.0
    %v238 = vmax.f32 %v214, 0.0
    %v239 = vmax.f32 %v219, 0.0
    %v240 = vmax.f32 %v222, 0.0
    %241 = vst [vmem:[#allocation2] sm:$0xff] %v225
    %242 = vst [vmem:[#allocation2 + $0x8] sm:$0xff] %v226
    %243 = vst [vmem:[#allocation2 + $0x10] sm:$0xff] %v227
    %244 = vst [vmem:[#allocation2 + $0x18] sm:$0xff] %v228
    %245 = vst [vmem:[#allocation2 + $0x20] sm:$0xff] %v229
    %246 = vst [vmem:[#allocation2 + $0x28] sm:$0xff] %v230
    %247 = vst [vmem:[#allocation2 + $0x30] sm:$0xff] %v231
    %248 = vst [vmem:[#allocation2 + $0x38] sm:$0xff] %v232
    %249 = vst [vmem:[#allocation2 + $0x40] sm:$0xff] %v233
    %250 = vst [vmem:[#allocation2 + $0x48] sm:$0xff] %v234
    %251 = vst [vmem:[#allocation2 + $0x50] sm:$0xff] %v235
    %252 = vst [vmem:[#allocation2 + $0x58] sm:$0xff] %v236
    %253 = vst [vmem:[#allocation2 + $0x60] sm:$0xff] %v237
    %254 = vst [vmem:[#allocation2 + $0x68] sm:$0xff] %v238
    %255 = vst [vmem:[#allocation2 + $0x70] sm:$0xff] %v239
    %256 = vst [vmem:[#allocation2 + $0x78] sm:$0xff] %v240
    // Predicated region
    $region14: #{tpu_custom_call.1} parent=1 // pred_check
      _
    $region15: #{tpu_custom_call.1} parent=1 // pred_check_branch
      %258 = sbr.rel (0) target = $region17
    $region16: #{tpu_custom_call.1} parent=1 // pred_region
      %s260 = ssub.s32 2048, 2048
      %261 = vsyncadd [#allocation3], %s260
      %s262 = sshll.u32 [#allocation2], 4
      %s263 = int_to_ptr.vmem [resolvable:$true] %s262
      %268 = dma.vmem_to_hbm [thread:$0]  %s263, 2048, %s3, [#allocation3], 128, 128, 8
    $region17: #{tpu_custom_call.1} parent=1 // pred_fallthru
      _
    // Predicated region
    $region18: #{tpu_custom_call.1} parent=1 // pred_check
      _
    $region19: #{tpu_custom_call.1} parent=1 // pred_check_branch
      %270 = sbr.rel (0) target = $region21
    $region20: #{tpu_custom_call.1} parent=1 // pred_region
      %271 = dma.done [#allocation3], 2048
    $region21: #{tpu_custom_call.1} parent=1 // pred_fallthru
      _
    %272 = vsyncpa [#allocation3], 1

</llo_original>
